<compile_context>
chip_gen: v7x
topology: tpu7x:2x2x1
jax: 0.10.0
libtpu: 0.0.40
codegen_flags: <defaults>
</compile_context>

<pallas_src>
import functools

import jax
import jax.numpy as jnp
import numpy as np
from jax import lax
from jax.experimental import pallas as pl
from jax.experimental.pallas import tpu as pltpu


def _round_up(a, b):
    return (a + b - 1) // b * b


def _vmem_capacity_bytes():
    """Trace-time VMEM capacity query; falls back to the smallest (v7x per-TC) size."""
    try:
        info = pltpu.get_tpu_info()
        cap = getattr(info, "vmem_capacity_bytes", None)
        if cap:
            return int(cap)
    except Exception:
        pass
    return 64 * 1024 * 1024


def _gelu(h, approx):
    if approx:
        # nn.GELU(approximate='tanh'): one EUP tanh + a few VPU ops (cheaper, not bit-exact).
        c = np.float32(np.sqrt(2.0 / np.pi))
        return 0.5 * h * (1.0 + jnp.tanh(c * (h + np.float32(0.044715) * h * h * h)))
    # Exact erf form: matches nn.GELU() default.
    return 0.5 * h * (1.0 + lax.erf(h * np.float32(1.0 / np.sqrt(2.0))))


def _layernorm_f32(x_any, g_ref, b_ref, eps):
    x = x_any.astype(jnp.float32)
    mean = jnp.mean(x, axis=-1, keepdims=True)
    var = jnp.mean(jnp.square(x - mean), axis=-1, keepdims=True)
    xn = (x - mean) * lax.rsqrt(var + eps)
    return xn * g_ref[...].astype(jnp.float32) + b_ref[...].astype(jnp.float32)


# --------------------------------------------------------------------------------------
# Fast path: weights fully VMEM-resident (1-D grid over row tiles, no accumulator scratch)
# --------------------------------------------------------------------------------------
def _ff_resident_kernel(x_ref, g_ref, bln_ref, w1_ref, b1_ref, w2_ref, b2_ref, o_ref,
                        *, eps, gelu_approx):
    xn = _layernorm_f32(x_ref[...], g_ref, bln_ref, eps).astype(jnp.bfloat16)   # (TM, dim)

    h = jnp.dot(xn, w1_ref[...], preferred_element_type=jnp.float32)            # (TM, hidden)
    h = h + b1_ref[...].astype(jnp.float32)
    h = _gelu(h, gelu_approx)

    y = jnp.dot(h.astype(jnp.bfloat16), w2_ref[...], preferred_element_type=jnp.float32)
    o_ref[...] = (y + b2_ref[...].astype(jnp.float32)).astype(o_ref.dtype)


# --------------------------------------------------------------------------------------
# Fallback path: hidden dimension tiled (weights restreamed), f32 accumulator in VMEM
# --------------------------------------------------------------------------------------
def _ff_tiled_kernel(x_ref, g_ref, bln_ref, w1_ref, b1_ref, w2_ref, b2_ref, o_ref,
                     xn_ref, acc_ref, *, eps, gelu_approx):
    k = pl.program_id(1)

    # LayerNorm hoisted: computed once per row tile, reused across all hidden tiles.
    @pl.when(k == 0)
    def _():
        xn_ref[...] = _layernorm_f32(x_ref[...], g_ref, bln_ref, eps).astype(xn_ref.dtype)

    h = jnp.dot(xn_ref[...], w1_ref[...], preferred_element_type=jnp.float32)   # (TM, TH)
    h = h + b1_ref[...].astype(jnp.float32)
    h = _gelu(h, gelu_approx)
    contrib = jnp.dot(h.astype(jnp.bfloat16), w2_ref[...],
                      preferred_element_type=jnp.float32)                        # (TM, dim)

    # Initialize with the first partial product (no zero-fill + read-modify-write at k==0).
    @pl.when(k == 0)
    def _():
        acc_ref[...] = contrib

    @pl.when(k > 0)
    def _():
        acc_ref[...] += contrib

    @pl.when(k == pl.num_programs(1) - 1)
    def _():
        o_ref[...] = (acc_ref[...] + b2_ref[...].astype(jnp.float32)).astype(o_ref.dtype)


def feed_forward(x, params, *, eps=1e-5, row_tile=None, hidden_tile=None, gelu_approx=False):
    """x: (B, N, dim) float32. params: dict of LN/Linear weights (f32)."""
    B, N, dim = x.shape
    hidden = params["w1"].shape[1]
    rows = B * N
    out_dtype = x.dtype
    out_isize = jnp.dtype(out_dtype).itemsize

    # Generation-aware VMEM budget: ~54 MiB on 64 MiB parts (v7x/TC), ~108 MiB on 128 MiB parts.
    vmem_cap = _vmem_capacity_bytes()
    vmem_limit = min(int(vmem_cap * 0.85), 110 * 1024 * 1024)

    hidden_full = _round_up(hidden, 128)

    def resident_footprint(rt):
        w = 2 * (4 * dim * hidden_full)          # bf16 w1+w2, conservatively counted x2 (buffers)
        xin = 2 * rt * dim * 2                   # bf16 x tile, double-buffered
        out = 2 * rt * dim * out_isize           # output tile, double-buffered
        h_tmp = rt * hidden_full * 4             # f32 hidden intermediate
        xn_tmp = rt * dim * 4                    # f32 LN intermediate
        small = 4 * (4 * dim + 4 * hidden_full)  # gamma/beta/b1/b2
        return w + xin + out + h_tmp + xn_tmp + small

    # Decide between the resident fast path and the hidden-tiled fallback.
    if hidden_tile is not None:
        ht = max(128, _round_up(min(hidden_tile, hidden_full), 128))
        resident = ht >= hidden_full
    else:
        rt_guess = max(128, min(_round_up(row_tile or 256, 128), _round_up(rows, 128)))
        resident = resident_footprint(rt_guess) <= int(vmem_limit * 0.9)
        ht = hidden_full if resident else min(512, hidden_full)
    if resident:
        ht = hidden_full

    # Row tile: 128-aligned (MXU/lane aligned on all generations); larger default on the
    # tiled path to amortize the weight restream.
    rt = row_tile if row_tile is not None else (256 if resident else 512)
    rt = max(128, _round_up(rt, 128))
    rt = min(rt, _round_up(rows, 128))

    rows_p = _round_up(rows, rt)
    hidden_p = _round_up(hidden, ht)

    # Activations in bf16 (halves HBM read traffic); LayerNorm is computed in f32 in-kernel.
    x2d = x.reshape(rows, dim).astype(jnp.bfloat16)
    if rows_p != rows:
        x2d = jnp.pad(x2d, ((0, rows_p - rows), (0, 0)))

    gamma = params["gamma"].reshape(1, dim)
    beta = params["beta"].reshape(1, dim)
    # Weights bf16 in HBM: halves DMA bytes + MXU-native; f32 accumulation on the MXU.
    w1 = params["w1"].astype(jnp.bfloat16)                       # (dim, hidden)
    b1 = params["b1"].reshape(1, hidden)
    w2 = params["w2"].astype(jnp.bfloat16)                       # (hidden, dim)
    b2 = params["b2"].reshape(1, dim)
    if hidden_p != hidden:
        # Zero-padded hidden: GELU(0)=0 and padded w2 rows are 0 -> no contribution.
        w1 = jnp.pad(w1, ((0, 0), (0, hidden_p - hidden)))
        b1 = jnp.pad(b1, ((0, 0), (0, hidden_p - hidden)))
        w2 = jnp.pad(w2, ((0, hidden_p - hidden), (0, 0)))

    if resident:
        grid = (rows_p // rt,)
        out2d = pl.pallas_call(
            functools.partial(_ff_resident_kernel, eps=eps, gelu_approx=gelu_approx),
            out_shape=jax.ShapeDtypeStruct((rows_p, dim), out_dtype),
            grid_spec=pltpu.PrefetchScalarGridSpec(
                num_scalar_prefetch=0,
                grid=grid,
                in_specs=[
                    pl.BlockSpec((rt, dim), lambda i: (i, 0)),             # x rows (streamed)
                    pl.BlockSpec((1, dim), lambda i: (0, 0)),              # gamma
                    pl.BlockSpec((1, dim), lambda i: (0, 0)),              # beta
                    pl.BlockSpec((dim, hidden_p), lambda i: (0, 0)),       # w1 (resident)
                    pl.BlockSpec((1, hidden_p), lambda i: (0, 0)),         # b1 (resident)
                    pl.BlockSpec((hidden_p, dim), lambda i: (0, 0)),       # w2 (resident)
                    pl.BlockSpec((1, dim), lambda i: (0, 0)),              # b2
                ],
                out_specs=pl.BlockSpec((rt, dim), lambda i: (i, 0)),
            ),
            compiler_params=pltpu.CompilerParams(
                dimension_semantics=("parallel",),   # row tiles shard across v7x's 2 TCs
                vmem_limit_bytes=vmem_limit,
            ),
        )(x2d, gamma, beta, w1, b1, w2, b2)
    else:
        grid = (rows_p // rt, hidden_p // ht)
        # TODO(synk): if xprof shows exposed weight DMA here, add pipeline_mode=pl.Buffered(3)
        # on the w1/w2 BlockSpecs.
        out2d = pl.pallas_call(
            functools.partial(_ff_tiled_kernel, eps=eps, gelu_approx=gelu_approx),
            out_shape=jax.ShapeDtypeStruct((rows_p, dim), out_dtype),
            grid_spec=pltpu.PrefetchScalarGridSpec(
                num_scalar_prefetch=0,
                grid=grid,
                in_specs=[
                    pl.BlockSpec((rt, dim), lambda i, k: (i, 0)),          # x rows
                    pl.BlockSpec((1, dim), lambda i, k: (0, 0)),           # gamma
                    pl.BlockSpec((1, dim), lambda i, k: (0, 0)),           # beta
                    pl.BlockSpec((dim, ht), lambda i, k: (0, k)),          # w1 tile
                    pl.BlockSpec((1, ht), lambda i, k: (0, k)),            # b1 tile
                    pl.BlockSpec((ht, dim), lambda i, k: (k, 0)),          # w2 tile
                    pl.BlockSpec((1, dim), lambda i, k: (0, 0)),           # b2
                ],
                out_specs=pl.BlockSpec((rt, dim), lambda i, k: (i, 0)),
                scratch_shapes=[
                    pltpu.VMEM((rt, dim), jnp.bfloat16),   # xn (LN result, reused across k)
                    pltpu.VMEM((rt, dim), jnp.float32),    # y accumulator
                ],
            ),
            compiler_params=pltpu.CompilerParams(
                dimension_semantics=("parallel", "arbitrary"),
                vmem_limit_bytes=vmem_limit,
            ),
        )(x2d, gamma, beta, w1, b1, w2, b2)

    return out2d[:rows].reshape(B, N, dim)


def _reference(x, params, eps=1e-5):
    mean = jnp.mean(x, axis=-1, keepdims=True)
    var = jnp.mean(jnp.square(x - mean), axis=-1, keepdims=True)
    xn = (x - mean) * lax.rsqrt(var + eps)
    xn = xn * params["gamma"] + params["beta"]
    h = xn @ params["w1"] + params["b1"]
    h = 0.5 * h * (1.0 + lax.erf(h / jnp.sqrt(2.0)))
    return h @ params["w2"] + params["b2"]


if __name__ == "__main__":
    key = jax.random.PRNGKey(0)
    # Small but lane-aligned shapes; rows=100 exercises row padding; forcing hidden_tile=128
    # on the second call exercises the tiled fallback (accumulator) path.
    B, N, dim, hidden = 2, 50, 128, 256

    k_x, k_w1, k_b1, k_w2, k_b2 = jax.random.split(key, 5)
    x = jax.random.normal(k_x, (B, N, dim), dtype=jnp.float32)

    params = {
        "gamma": jnp.ones((dim,), jnp.float32),
        "beta": jnp.zeros((dim,), jnp.float32),
        # nn.Linear-style uniform init, deterministic via PRNGKey(0) splits.
        "w1": jax.random.uniform(k_w1, (dim, hidden), jnp.float32,
                                 -1.0 / np.sqrt(dim), 1.0 / np.sqrt(dim)),
        "b1": jax.random.uniform(k_b1, (hidden,), jnp.float32,
                                 -1.0 / np.sqrt(dim), 1.0 / np.sqrt(dim)),
        "w2": jax.random.uniform(k_w2, (hidden, dim), jnp.float32,
                                 -1.0 / np.sqrt(hidden), 1.0 / np.sqrt(hidden)),
        "b2": jax.random.uniform(k_b2, (dim,), jnp.float32,
                                 -1.0 / np.sqrt(hidden), 1.0 / np.sqrt(hidden)),
    }

    ref = _reference(x, params)

    # Fast path: weights fully VMEM-resident (auto-selected), no accumulator scratch.
    out_resident = jax.block_until_ready(feed_forward(x, params))
    # bf16 activations + bf16 matmul operands (f32 accumulation) -> relaxed tolerance.
    np.testing.assert_allclose(np.asarray(out_resident), np.asarray(ref), rtol=3e-2, atol=3e-2)

    # Fallback path: hidden tiled with f32 accumulator (forced via hidden_tile=128 < hidden).
    out_tiled = jax.block_until_ready(feed_forward(x, params, row_tile=128, hidden_tile=128))
    np.testing.assert_allclose(np.asarray(out_tiled), np.asarray(ref), rtol=3e-2, atol=3e-2)

    print("KERNEL_OK")
</pallas_src>

<mosaic_0001>
module attributes {stable_mosaic.version = 11 : i64} {
  func.func @_ff_resident_kernel(%arg0: i32, %arg1: memref<128x128xbf16, #tpu.memory_space<vmem>>, %arg2: memref<1x128xf32, #tpu.memory_space<vmem>>, %arg3: memref<1x128xf32, #tpu.memory_space<vmem>>, %arg4: memref<128x256xbf16, #tpu.memory_space<vmem>>, %arg5: memref<1x256xf32, #tpu.memory_space<vmem>>, %arg6: memref<256x128xbf16, #tpu.memory_space<vmem>>, %arg7: memref<1x128xf32, #tpu.memory_space<vmem>>, %arg8: memref<128x128xf32, #tpu.memory_space<vmem>>) attributes {dimension_semantics = [#tpu.dimension_semantics<parallel>], iteration_bounds = array<i64: 1>, scalar_prefetch = 0 : i64, scratch_operands = 0 : i64, tpu.core_type = #tpu.core_type<tc>, window_params = [{transform_indices = @transform_0, window_bounds = array<i64: 128, 128>}, {pipeline_mode = #tpu.pipeline_mode<synchronous>, transform_indices = @transform_1, window_bounds = array<i64: 1, 128>}, {pipeline_mode = #tpu.pipeline_mode<synchronous>, transform_indices = @transform_2, window_bounds = array<i64: 1, 128>}, {pipeline_mode = #tpu.pipeline_mode<synchronous>, transform_indices = @transform_3, window_bounds = array<i64: 128, 256>}, {pipeline_mode = #tpu.pipeline_mode<synchronous>, transform_indices = @transform_4, window_bounds = array<i64: 1, 256>}, {pipeline_mode = #tpu.pipeline_mode<synchronous>, transform_indices = @transform_5, window_bounds = array<i64: 256, 128>}, {pipeline_mode = #tpu.pipeline_mode<synchronous>, transform_indices = @transform_6, window_bounds = array<i64: 1, 128>}, {transform_indices = @transform_7, window_bounds = array<i64: 128, 128>}]} {
    %c0 = arith.constant 0 : index
    %c0_0 = arith.constant 0 : index
    %0 = vector.load %arg1[%c0, %c0_0] : memref<128x128xbf16, #tpu.memory_space<vmem>>, vector<128x128xbf16>
    %1 = arith.extf %0 : vector<128x128xbf16> to vector<128x128xf32>
    %cst = arith.constant dense<0.000000e+00> : vector<128xf32>
    %2 = vector.multi_reduction <add>, %1, %cst [1] : vector<128x128xf32> to vector<128xf32>
    %3 = vector.shape_cast %2 : vector<128xf32> to vector<128x1xf32>
    %cst_1 = arith.constant 1.280000e+02 : f32
    %4 = vector.broadcast %cst_1 : f32 to vector<128x1xf32>
    %5 = arith.divf %3, %4 : vector<128x1xf32>
    %6 = vector.broadcast %5 : vector<128x1xf32> to vector<128x128xf32>
    %7 = arith.subf %1, %6 : vector<128x128xf32>
    %8 = arith.mulf %7, %7 : vector<128x128xf32>
    %cst_2 = arith.constant dense<0.000000e+00> : vector<128xf32>
    %9 = vector.multi_reduction <add>, %8, %cst_2 [1] : vector<128x128xf32> to vector<128xf32>
    %10 = vector.shape_cast %9 : vector<128xf32> to vector<128x1xf32>
    %cst_3 = arith.constant 1.280000e+02 : f32
    %11 = vector.broadcast %cst_3 : f32 to vector<128x1xf32>
    %12 = arith.divf %10, %11 : vector<128x1xf32>
    %13 = vector.broadcast %5 : vector<128x1xf32> to vector<128x128xf32>
    %14 = arith.subf %1, %13 : vector<128x128xf32>
    %cst_4 = arith.constant 9.99999974E-6 : f32
    %15 = vector.broadcast %cst_4 : f32 to vector<128x1xf32>
    %16 = arith.addf %12, %15 : vector<128x1xf32>
    %17 = math.rsqrt %16 : vector<128x1xf32>
    %18 = vector.broadcast %17 : vector<128x1xf32> to vector<128x128xf32>
    %19 = arith.mulf %14, %18 : vector<128x128xf32>
    %c0_5 = arith.constant 0 : index
    %c0_6 = arith.constant 0 : index
    %20 = vector.load %arg2[%c0_5, %c0_6] : memref<1x128xf32, #tpu.memory_space<vmem>>, vector<1x128xf32>
    %21 = vector.broadcast %20 : vector<1x128xf32> to vector<128x128xf32>
    %22 = arith.mulf %19, %21 : vector<128x128xf32>
    %c0_7 = arith.constant 0 : index
    %c0_8 = arith.constant 0 : index
    %23 = vector.load %arg3[%c0_7, %c0_8] : memref<1x128xf32, #tpu.memory_space<vmem>>, vector<1x128xf32>
    %24 = vector.broadcast %23 : vector<1x128xf32> to vector<128x128xf32>
    %25 = arith.addf %22, %24 : vector<128x128xf32>
    %26 = arith.truncf %25 : vector<128x128xf32> to vector<128x128xbf16>
    %c0_9 = arith.constant 0 : index
    %c0_10 = arith.constant 0 : index
    %27 = vector.load %arg4[%c0_9, %c0_10] : memref<128x256xbf16, #tpu.memory_space<vmem>>, vector<128x256xbf16>
    %cst_11 = arith.constant dense<0.000000e+00> : vector<128x256xf32>
    %28 = tpu.matmul %26, %27, %cst_11 {dimension_numbers = #tpu.dot_dimension_numbers<[1], [0], [0], [1], [0, 0, 1, 1], [], []>} : vector<128x128xbf16>, vector<128x256xbf16>, vector<128x256xf32> -> vector<128x256xf32>
    %c0_12 = arith.constant 0 : index
    %c0_13 = arith.constant 0 : index
    %29 = vector.load %arg5[%c0_12, %c0_13] : memref<1x256xf32, #tpu.memory_space<vmem>>, vector<1x256xf32>
    %30 = vector.broadcast %29 : vector<1x256xf32> to vector<128x256xf32>
    %31 = arith.addf %28, %30 : vector<128x256xf32>
    %cst_14 = arith.constant 5.000000e-01 : f32
    %32 = vector.broadcast %cst_14 : f32 to vector<128x256xf32>
    %33 = arith.mulf %32, %31 : vector<128x256xf32>
    %cst_15 = arith.constant 0.707106769 : f32
    %34 = vector.broadcast %cst_15 : f32 to vector<128x256xf32>
    %35 = arith.mulf %31, %34 : vector<128x256xf32>
    %36 = math.erf %35 : vector<128x256xf32>
    %cst_16 = arith.constant 1.000000e+00 : f32
    %37 = vector.broadcast %cst_16 : f32 to vector<128x256xf32>
    %38 = arith.addf %37, %36 : vector<128x256xf32>
    %39 = arith.mulf %33, %38 : vector<128x256xf32>
    %40 = arith.truncf %39 : vector<128x256xf32> to vector<128x256xbf16>
    %c0_17 = arith.constant 0 : index
    %c0_18 = arith.constant 0 : index
    %41 = vector.load %arg6[%c0_17, %c0_18] : memref<256x128xbf16, #tpu.memory_space<vmem>>, vector<256x128xbf16>
    %cst_19 = arith.constant dense<0.000000e+00> : vector<128x128xf32>
    %42 = tpu.matmul %40, %41, %cst_19 {dimension_numbers = #tpu.dot_dimension_numbers<[1], [0], [0], [1], [0, 0, 1, 1], [], []>} : vector<128x256xbf16>, vector<256x128xbf16>, vector<128x128xf32> -> vector<128x128xf32>
    %c0_20 = arith.constant 0 : index
    %c0_21 = arith.constant 0 : index
    %43 = vector.load %arg7[%c0_20, %c0_21] : memref<1x128xf32, #tpu.memory_space<vmem>>, vector<1x128xf32>
    %44 = vector.broadcast %43 : vector<1x128xf32> to vector<128x128xf32>
    %45 = arith.addf %42, %44 : vector<128x128xf32>
    %c0_22 = arith.constant 0 : index
    %c0_23 = arith.constant 0 : index
    %46 = vector.load %arg8[%c0_22, %c0_23] : memref<128x128xf32, #tpu.memory_space<vmem>>, vector<128x128xf32>
    tpu.vector_store %arg8[%c0_22, %c0_23], %45 {strides = array<i32>} : memref<128x128xf32, #tpu.memory_space<vmem>>, vector<128x128xf32>,
    return
  }
  func.func @transform_0(%arg0: i32) -> (i32, i32) {
    %c0_i32 = arith.constant 0 : i32
    %c0_i32_0 = arith.constant 0 : i32
    return %arg0, %c0_i32 : i32, i32
  }
  func.func @transform_1(%arg0: i32) -> (i32, i32) {
    %c0_i32 = arith.constant 0 : i32
    %c0_i32_0 = arith.constant 0 : i32
    %c0_i32_1 = arith.constant 0 : i32
    return %c0_i32, %c0_i32_0 : i32, i32
  }
  func.func @transform_2(%arg0: i32) -> (i32, i32) {
    %c0_i32 = arith.constant 0 : i32
    %c0_i32_0 = arith.constant 0 : i32
    %c0_i32_1 = arith.constant 0 : i32
    return %c0_i32, %c0_i32_0 : i32, i32
  }
  func.func @transform_3(%arg0: i32) -> (i32, i32) {
    %c0_i32 = arith.constant 0 : i32
    %c0_i32_0 = arith.constant 0 : i32
    %c0_i32_1 = arith.constant 0 : i32
    return %c0_i32, %c0_i32_0 : i32, i32
  }
  func.func @transform_4(%arg0: i32) -> (i32, i32) {
    %c0_i32 = arith.constant 0 : i32
    %c0_i32_0 = arith.constant 0 : i32
    %c0_i32_1 = arith.constant 0 : i32
    return %c0_i32, %c0_i32_0 : i32, i32
  }
  func.func @transform_5(%arg0: i32) -> (i32, i32) {
    %c0_i32 = arith.constant 0 : i32
    %c0_i32_0 = arith.constant 0 : i32
    %c0_i32_1 = arith.constant 0 : i32
    return %c0_i32, %c0_i32_0 : i32, i32
  }
  func.func @transform_6(%arg0: i32) -> (i32, i32) {
    %c0_i32 = arith.constant 0 : i32
    %c0_i32_0 = arith.constant 0 : i32
    %c0_i32_1 = arith.constant 0 : i32
    return %c0_i32, %c0_i32_0 : i32, i32
  }
  func.func @transform_7(%arg0: i32) -> (i32, i32) {
    %c0_i32 = arith.constant 0 : i32
    %c0_i32_0 = arith.constant 0 : i32
    return %arg0, %c0_i32 : i32, i32
  }
}

</mosaic_0001>

<llo_original>
// kernel: tpu_custom_call.1
$region0: #{tpu_custom_call.1}
  #allocation0 [shape = 'u32[]', space=smem, size = 0x4, offset = 0x4, fixed_abs, tag = 'smem constant byte address 0x4 - core index']
  #allocation1 [shape = 'u32[144,128]{1,0:T(1,128)}', space=vmem, size = 0x12000, scoped, tag = 'internal scratch']
  %s0 = inlined_call_operand.hbm [shape: bf16[128,128], index: 0, kind: input, shape index: {}]
  %s1 = inlined_call_operand.vmem [shape: f32[1,128], index: 1, kind: input, shape index: {}]
  %s2 = inlined_call_operand.vmem [shape: f32[1,128], index: 2, kind: input, shape index: {}]
  %s3 = inlined_call_operand.hbm [shape: bf16[128,256], index: 3, kind: input, shape index: {}]
  %s4 = inlined_call_operand.vmem [shape: f32[1,256], index: 4, kind: input, shape index: {}]
  %s5 = inlined_call_operand.hbm [shape: bf16[256,128], index: 5, kind: input, shape index: {}]
  %s6 = inlined_call_operand.vmem [shape: f32[1,128], index: 6, kind: input, shape index: {}]
  %s7 = inlined_call_operand.hbm [shape: f32[128,128], index: 7, kind: output, shape index: {}]
  %s8 = sld [smem:[#allocation0]]
  $region50: #{tpu_custom_call.1} parent=0
    _
  %s10 = ssub.s32 1, %s8
  %s11 = scalar_select 0, %s10, %s8
  $region1: #{tpu_custom_call.1} parent=0
    #allocation2 [shape = 'u8[32768]{0}', space=vmem, size = 0x8000, scoped, tag = 'input window, operand 0, single buffered']
    #allocation3 [shape = 's32[1]{0}', space=sflag, size = 0x4, scoped, tag = 'scoped memory for tpu_custom_call.1']
    #allocation4 [shape = 's32[1]{0}', space=sflag, size = 0x4, scoped, tag = 'scoped memory for tpu_custom_call.1']
    #allocation5 [shape = 'u8[65536]{0}', space=vmem, size = 0x10000, scoped, tag = 'input window, operand 3, single buffered']
    #allocation6 [shape = 's32[1]{0}', space=sflag, size = 0x4, scoped, tag = 'scoped memory for tpu_custom_call.1']
    #allocation7 [shape = 'u8[65536]{0}', space=vmem, size = 0x10000, scoped, tag = 'input window, operand 5, single buffered']
    #allocation8 [shape = 'u8[65536]{0}', space=vmem, size = 0x10000, scoped, tag = 'output window, operand 0, single buffered']
    %12 = vsyncpa [#allocation3], 0
    %13 = vsyncpa [#allocation6], 0
    %14 = vsyncpa [#allocation4], 0
    // Predicated region
    $region2: #{tpu_custom_call.1} parent=1 // pred_check
      _
    $region3: #{tpu_custom_call.1} parent=1 // pred_check_branch
      %16 = sbr.rel (0) target = $region5
    $region4: #{tpu_custom_call.1} parent=1 // pred_region
      %s18 = ssub.s32 1024, 1024
      %19 = vsyncadd [#allocation3], %s18
      %s20 = sshll.u32 [#allocation2], 4
      %s21 = int_to_ptr.vmem [resolvable:$true] %s20
      %26 = dma.hbm_to_vmem [thread:$0]  %s0, 1024, %s21, [#allocation3], 64, 64, 4
    $region5: #{tpu_custom_call.1} parent=1 // pred_fallthru
      _
    // Predicated region
    $region6: #{tpu_custom_call.1} parent=1 // pred_check
      _
    $region7: #{tpu_custom_call.1} parent=1 // pred_check_branch
      %28 = sbr.rel (0) target = $region9
    $region8: #{tpu_custom_call.1} parent=1 // pred_region
      _
    $region9: #{tpu_custom_call.1} parent=1 // pred_fallthru
      _
    // Predicated region
    $region10: #{tpu_custom_call.1} parent=1 // pred_check
      _
    $region11: #{tpu_custom_call.1} parent=1 // pred_check_branch
      %30 = sbr.rel (0) target = $region13
    $region12: #{tpu_custom_call.1} parent=1 // pred_region
      _
    $region13: #{tpu_custom_call.1} parent=1 // pred_fallthru
      _
    // Predicated region
    $region14: #{tpu_custom_call.1} parent=1 // pred_check
      _
    $region15: #{tpu_custom_call.1} parent=1 // pred_check_branch
      %32 = sbr.rel (0) target = $region17
    $region16: #{tpu_custom_call.1} parent=1 // pred_region
      %s34 = ssub.s32 2048, 2048
      %35 = vsyncadd [#allocation6], %s34
      %s36 = sshll.u32 [#allocation5], 4
      %s37 = int_to_ptr.vmem [resolvable:$true] %s36
      %42 = dma.hbm_to_vmem [thread:$0]  %s3, 2048, %s37, [#allocation6], 128, 128, 8
    $region17: #{tpu_custom_call.1} parent=1 // pred_fallthru
      _
    // Predicated region
    $region18: #{tpu_custom_call.1} parent=1 // pred_check
      _
    $region19: #{tpu_custom_call.1} parent=1 // pred_check_branch
      %44 = sbr.rel (0) target = $region21
    $region20: #{tpu_custom_call.1} parent=1 // pred_region
      _
    $region21: #{tpu_custom_call.1} parent=1 // pred_fallthru
      _
    // Predicated region
    $region22: #{tpu_custom_call.1} parent=1 // pred_check
      _
    $region23: #{tpu_custom_call.1} parent=1 // pred_check_branch
      %46 = sbr.rel (0) target = $region25
    $region24: #{tpu_custom_call.1} parent=1 // pred_region
      %s48 = ssub.s32 2048, 2048
      %49 = vsyncadd [#allocation6], %s48
      %s50 = sshll.u32 [#allocation7], 4
      %s51 = int_to_ptr.vmem [resolvable:$true] %s50
      %56 = dma.hbm_to_vmem [thread:$0]  %s5, 2048, %s51, [#allocation6], 64, 64, 4
    $region25: #{tpu_custom_call.1} parent=1 // pred_fallthru
      _
    // Predicated region
    $region26: #{tpu_custom_call.1} parent=1 // pred_check
      _
    $region27: #{tpu_custom_call.1} parent=1 // pred_check_branch
      %58 = sbr.rel (0) target = $region29
    $region28: #{tpu_custom_call.1} parent=1 // pred_region
      _
    $region29: #{tpu_custom_call.1} parent=1 // pred_fallthru
      _
    // Predicated region
    $region30: #{tpu_custom_call.1} parent=1 // pred_check
      _
    $region31: #{tpu_custom_call.1} parent=1 // pred_check_branch
      %60 = sbr.rel (0) target = $region33
    $region32: #{tpu_custom_call.1} parent=1 // pred_region
      %61 = dma.done [#allocation3], 1024
    $region33: #{tpu_custom_call.1} parent=1 // pred_fallthru
      _
    // Predicated region
    $region34: #{tpu_custom_call.1} parent=1 // pred_check
      _
    $region35: #{tpu_custom_call.1} parent=1 // pred_check_branch
      %63 = sbr.rel (0) target = $region37
    $region36: #{tpu_custom_call.1} parent=1 // pred_region
      %64 = dma.done [#allocation6], 2048
    $region37: #{tpu_custom_call.1} parent=1 // pred_fallthru
      _
    // Predicated region
    $region38: #{tpu_custom_call.1} parent=1 // pred_check
      _
    $region39: #{tpu_custom_call.1} parent=1 // pred_check_branch
      %66 = sbr.rel (0) target = $region41
    $region40: #{tpu_custom_call.1} parent=1 // pred_region
      %67 = dma.done [#allocation6], 2048
    $region41: #{tpu_custom_call.1} parent=1 // pred_fallthru
      _
    %v69 = vld [vmem:[#allocation2] sm:$0xf]
    %v70 = vld [vmem:[#allocation2 + $0x4] sm:$0xf]
    %v71 = vld [vmem:[#allocation2 + $0x8] sm:$0xf]
    %v72 = vld [vmem:[#allocation2 + $0xc] sm:$0xf]
    %v73 = vld [vmem:[#allocation2 + $0x10] sm:$0xf]
    %v74 = vld [vmem:[#allocation2 + $0x14] sm:$0xf]
    %v75 = vld [vmem:[#allocation2 + $0x18] sm:$0xf]
    %v76 = vld [vmem:[#allocation2 + $0x1c] sm:$0xf]
    %v77 = vld [vmem:[#allocation2 + $0x20] sm:$0xf]
    %v78 = vld [vmem:[#allocation2 + $0x24] sm:$0xf]
    %v79 = vld [vmem:[#allocation2 + $0x28] sm:$0xf]
    %v80 = vld [vmem:[#allocation2 + $0x2c] sm:$0xf]
    %v81 = vld [vmem:[#allocation2 + $0x30] sm:$0xf]
    %v82 = vld [vmem:[#allocation2 + $0x34] sm:$0xf]
    %v83 = vld [vmem:[#allocation2 + $0x38] sm:$0xf]
    %v84 = vld [vmem:[#allocation2 + $0x3c] sm:$0xf]
    %v85 = vunpack.c.l.bf16 %v69
    %v86 = vunpack.c.l.bf16 %v70
    %v87 = vunpack.c.l.bf16 %v71
    %v88 = vunpack.c.l.bf16 %v72
    %v89 = vunpack.c.l.bf16 %v73
    %v90 = vunpack.c.l.bf16 %v74
    %v91 = vunpack.c.l.bf16 %v75
    %v92 = vunpack.c.l.bf16 %v76
    %v93 = vunpack.c.l.bf16 %v77
    %v94 = vunpack.c.l.bf16 %v78
    %v95 = vunpack.c.l.bf16 %v79
    %v96 = vunpack.c.l.bf16 %v80
    %v97 = vunpack.c.l.bf16 %v81
    %v98 = vunpack.c.l.bf16 %v82
    %v99 = vunpack.c.l.bf16 %v83
    %v100 = vunpack.c.l.bf16 %v84
    %101 = vadd.xlane.f32.xlu0 %v85
    %v102 = vpop.xlane.xlu0 %101
    %103 = vadd.xlane.f32.xlu0 %v86
    %v104 = vpop.xlane.xlu0 %103
    %105 = vadd.xlane.f32.xlu0 %v87
    %v106 = vpop.xlane.xlu0 %105
    %107 = vadd.xlane.f32.xlu0 %v88
    %v108 = vpop.xlane.xlu0 %107
    %109 = vadd.xlane.f32.xlu0 %v89
    %v110 = vpop.xlane.xlu0 %109
    %111 = vadd.xlane.f32.xlu0 %v90
    %v112 = vpop.xlane.xlu0 %111
    %113 = vadd.xlane.f32.xlu0 %v91
    %v114 = vpop.xlane.xlu0 %113
    %115 = vadd.xlane.f32.xlu0 %v92
    %v116 = vpop.xlane.xlu0 %115
    %117 = vadd.xlane.f32.xlu0 %v93
    %v118 = vpop.xlane.xlu0 %117
    %119 = vadd.xlane.f32.xlu0 %v94
    %v120 = vpop.xlane.xlu0 %119
    %121 = vadd.xlane.f32.xlu0 %v95
    %v122 = vpop.xlane.xlu0 %121
    %123 = vadd.xlane.f32.xlu0 %v96
    %v124 = vpop.xlane.xlu0 %123
    %125 = vadd.xlane.f32.xlu0 %v97
    %v126 = vpop.xlane.xlu0 %125
    %127 = vadd.xlane.f32.xlu0 %v98
    %v128 = vpop.xlane.xlu0 %127
    %129 = vadd.xlane.f32.xlu0 %v99
    %v130 = vpop.xlane.xlu0 %129
    %131 = vadd.xlane.f32.xlu0 %v100
    %v132 = vpop.xlane.xlu0 %131
    %v133 = vrcp.pop 128.0
    %v134 = vmul.f32 %v102, %v133
    %v135 = vmul.f32 %v104, %v133
    %v136 = vmul.f32 %v106, %v133
    %v137 = vmul.f32 %v108, %v133
    %v138 = vmul.f32 %v110, %v133
    %v139 = vmul.f32 %v112, %v133
    %v140 = vmul.f32 %v114, %v133
    %v141 = vmul.f32 %v116, %v133
    %v142 = vmul.f32 %v118, %v133
    %v143 = vmul.f32 %v120, %v133
    %v144 = vmul.f32 %v122, %v133
    %v145 = vmul.f32 %v124, %v133
    %v146 = vmul.f32 %v126, %v133
    %v147 = vmul.f32 %v128, %v133
    %v148 = vmul.f32 %v130, %v133
    %v149 = vmul.f32 %v132, %v133
    %v150 = vsub.f32 %v85, %v134
    %v151 = vsub.f32 %v86, %v135
    %v152 = vsub.f32 %v87, %v136
    %v153 = vsub.f32 %v88, %v137
    %v154 = vsub.f32 %v89, %v138
    %v155 = vsub.f32 %v90, %v139
    %v156 = vsub.f32 %v91, %v140
    %v157 = vsub.f32 %v92, %v141
    %v158 = vsub.f32 %v93, %v142
    %v159 = vsub.f32 %v94, %v143
    %v160 = vsub.f32 %v95, %v144
    %v161 = vsub.f32 %v96, %v145
    %v162 = vsub.f32 %v97, %v146
    %v163 = vsub.f32 %v98, %v147
    %v164 = vsub.f32 %v99, %v148
    %v165 = vsub.f32 %v100, %v149
    %v166 = vmul.f32 %v150, %v150
    %v167 = vmul.f32 %v151, %v151
    %v168 = vmul.f32 %v152, %v152
    %v169 = vmul.f32 %v153, %v153
    %v170 = vmul.f32 %v154, %v154
    %v171 = vmul.f32 %v155, %v155
    %v172 = vmul.f32 %v156, %v156
    %v173 = vmul.f32 %v157, %v157
    %v174 = vmul.f32 %v158, %v158
    %v175 = vmul.f32 %v159, %v159
    %v176 = vmul.f32 %v160, %v160
    %v177 = vmul.f32 %v161, %v161
    %v178 = vmul.f32 %v162, %v162
    %v179 = vmul.f32 %v163, %v163
    %v180 = vmul.f32 %v164, %v164
    %v181 = vmul.f32 %v165, %v165
    %182 = vadd.xlane.f32.xlu0 %v166
    %v183 = vpop.xlane.xlu0 %182
    %184 = vadd.xlane.f32.xlu0 %v167
    %v185 = vpop.xlane.xlu0 %184
    %186 = vadd.xlane.f32.xlu0 %v168
    %v187 = vpop.xlane.xlu0 %186
    %188 = vadd.xlane.f32.xlu0 %v169
    %v189 = vpop.xlane.xlu0 %188
    %190 = vadd.xlane.f32.xlu0 %v170
    %v191 = vpop.xlane.xlu0 %190
    %192 = vadd.xlane.f32.xlu0 %v171
    %v193 = vpop.xlane.xlu0 %192
    %194 = vadd.xlane.f32.xlu0 %v172
    %v195 = vpop.xlane.xlu0 %194
    %196 = vadd.xlane.f32.xlu0 %v173
    %v197 = vpop.xlane.xlu0 %196
    %198 = vadd.xlane.f32.xlu0 %v174
    %v199 = vpop.xlane.xlu0 %198
    %200 = vadd.xlane.f32.xlu0 %v175
    %v201 = vpop.xlane.xlu0 %200
    %202 = vadd.xlane.f32.xlu0 %v176
    %v203 = vpop.xlane.xlu0 %202
    %204 = vadd.xlane.f32.xlu0 %v177
    %v205 = vpop.xlane.xlu0 %204
    %206 = vadd.xlane.f32.xlu0 %v178
    %v207 = vpop.xlane.xlu0 %206
    %208 = vadd.xlane.f32.xlu0 %v179
    %v209 = vpop.xlane.xlu0 %208
    %210 = vadd.xlane.f32.xlu0 %v180
    %v211 = vpop.xlane.xlu0 %210
    %212 = vadd.xlane.f32.xlu0 %v181
    %v213 = vpop.xlane.xlu0 %212
    %v214 = vmul.f32 %v183, %v133
    %v215 = vmul.f32 %v185, %v133
    %v216 = vmul.f32 %v187, %v133
    %v217 = vmul.f32 %v189, %v133
    %v218 = vmul.f32 %v191, %v133
    %v219 = vmul.f32 %v193, %v133
    %v220 = vmul.f32 %v195, %v133
    %v221 = vmul.f32 %v197, %v133
    %v222 = vmul.f32 %v199, %v133
    %v223 = vmul.f32 %v201, %v133
    %v224 = vmul.f32 %v203, %v133
    %v225 = vmul.f32 %v205, %v133
    %v226 = vmul.f32 %v207, %v133
    %v227 = vmul.f32 %v209, %v133
    %v228 = vmul.f32 %v211, %v133
    %v229 = vmul.f32 %v213, %v133
    %v230 = vadd.f32 %v214, 1e-05
    %v231 = vadd.f32 %v215, 1e-05
    %v232 = vadd.f32 %v216, 1e-05
    %v233 = vadd.f32 %v217, 1e-05
    %v234 = vadd.f32 %v218, 1e-05
    %v235 = vadd.f32 %v219, 1e-05
    %v236 = vadd.f32 %v220, 1e-05
    %v237 = vadd.f32 %v221, 1e-05
    %v238 = vadd.f32 %v222, 1e-05
    %v239 = vadd.f32 %v223, 1e-05
    %v240 = vadd.f32 %v224, 1e-05
    %v241 = vadd.f32 %v225, 1e-05
    %v242 = vadd.f32 %v226, 1e-05
    %v243 = vadd.f32 %v227, 1e-05
    %v244 = vadd.f32 %v228, 1e-05
    %v245 = vadd.f32 %v229, 1e-05
    %v246 = vrsqrt.pop %v230
    %v247 = vrsqrt.pop %v231
    %v248 = vrsqrt.pop %v232
    %v249 = vrsqrt.pop %v233
    %v250 = vrsqrt.pop %v234
    %v251 = vrsqrt.pop %v235
    %v252 = vrsqrt.pop %v236
    %v253 = vrsqrt.pop %v237
    %v254 = vrsqrt.pop %v238
    %v255 = vrsqrt.pop %v239
    %v256 = vrsqrt.pop %v240
    %v257 = vrsqrt.pop %v241
    %v258 = vrsqrt.pop %v242
    %v259 = vrsqrt.pop %v243
    %v260 = vrsqrt.pop %v244
    %v261 = vrsqrt.pop %v245
    %v262 = vmul.f32 %v150, %v246
    %v263 = vmul.f32 %v151, %v247
    %v264 = vmul.f32 %v152, %v248
    %v265 = vmul.f32 %v153, %v249
    %v266 = vmul.f32 %v154, %v250
    %v267 = vmul.f32 %v155, %v251
    %v268 = vmul.f32 %v156, %v252
    %v269 = vmul.f32 %v157, %v253
    %v270 = vmul.f32 %v158, %v254
    %v271 = vmul.f32 %v159, %v255
    %v272 = vmul.f32 %v160, %v256
    %v273 = vmul.f32 %v161, %v257
    %v274 = vmul.f32 %v162, %v258
    %v275 = vmul.f32 %v163, %v259
    %v276 = vmul.f32 %v164, %v260
    %v277 = vmul.f32 %v165, %v261
    %v278 = vld [vmem:[%s1] sm:$0x1]
    %v280 = vlaneseq
    %v281 = vshrl.u32 %v280, 7
    %v282 = vsub.s32 0, %v281
    %v283 = vrot.slane %v278, %v282
    %v285 = vmul.f32 %v262, %v283
    %v286 = vmul.f32 %v263, %v283
    %v287 = vmul.f32 %v264, %v283
    %v288 = vmul.f32 %v265, %v283
    %v289 = vmul.f32 %v266, %v283
    %v290 = vmul.f32 %v267, %v283
    %v291 = vmul.f32 %v268, %v283
    %v292 = vmul.f32 %v269, %v283
    %v293 = vmul.f32 %v270, %v283
    %v294 = vmul.f32 %v271, %v283
    %v295 = vmul.f32 %v272, %v283
    %v296 = vmul.f32 %v273, %v283
    %v297 = vmul.f32 %v274, %v283
    %v298 = vmul.f32 %v275, %v283
    %v299 = vmul.f32 %v276, %v283
    %v300 = vmul.f32 %v277, %v283
    %v301 = vld [vmem:[%s2] sm:$0x1]
    %v303 = vlaneseq
    %v304 = vshrl.u32 %v303, 7
    %v305 = vsub.s32 0, %v304
    %v306 = vrot.slane %v301, %v305
    %v308 = vadd.f32 %v285, %v306
    %v309 = vadd.f32 %v286, %v306
    %v310 = vadd.f32 %v287, %v306
    %v311 = vadd.f32 %v288, %v306
    %v312 = vadd.f32 %v289, %v306
    %v313 = vadd.f32 %v290, %v306
    %v314 = vadd.f32 %v291, %v306
    %v315 = vadd.f32 %v292, %v306
    %v316 = vadd.f32 %v293, %v306
    %v317 = vadd.f32 %v294, %v306
    %v318 = vadd.f32 %v295, %v306
    %v319 = vadd.f32 %v296, %v306
    %v320 = vadd.f32 %v297, %v306
    %v321 = vadd.f32 %v298, %v306
    %v322 = vadd.f32 %v299, %v306
    %v323 = vadd.f32 %v300, %v306
    %v324 = vpack.c.bf16 %v309, %v308
    %v325 = vpack.c.bf16 %v311, %v310
    %v326 = vpack.c.bf16 %v313, %v312
    %v327 = vpack.c.bf16 %v315, %v314
    %v328 = vpack.c.bf16 %v317, %v316
    %v329 = vpack.c.bf16 %v319, %v318
    %v330 = vpack.c.bf16 %v321, %v320
    %v331 = vpack.c.bf16 %v323, %v322
    %v332 = vld [vmem:[#allocation5] sm:$0xff]
    %v333 = vld [vmem:[#allocation5 + $0x8] sm:$0xff]
    %v334 = vld [vmem:[#allocation5 + $0x10] sm:$0xff]
    %v335 = vld [vmem:[#allocation5 + $0x18] sm:$0xff]
    %v336 = vld [vmem:[#allocation5 + $0x20] sm:$0xff]
    %v337 = vld [vmem:[#allocation5 + $0x28] sm:$0xff]
    %v338 = vld [vmem:[#allocation5 + $0x30] sm:$0xff]
    %v339 = vld [vmem:[#allocation5 + $0x38] sm:$0xff]
    %v340 = vld [vmem:[#allocation5 + $0x40] sm:$0xff]
    %v341 = vld [vmem:[#allocation5 + $0x48] sm:$0xff]
    %v342 = vld [vmem:[#allocation5 + $0x50] sm:$0xff]
    %v343 = vld [vmem:[#allocation5 + $0x58] sm:$0xff]
    %v344 = vld [vmem:[#allocation5 + $0x60] sm:$0xff]
    %v345 = vld [vmem:[#allocation5 + $0x68] sm:$0xff]
    %v346 = vld [vmem:[#allocation5 + $0x70] sm:$0xff]
    %v347 = vld [vmem:[#allocation5 + $0x78] sm:$0xff]
    %v348 = vld [vmem:[%s4] sm:$0x3]
    %v350 = vlaneseq
    %v351 = vshrl.u32 %v350, 7
    %v352 = vsub.s32 0, %v351
    %v353 = vrot.slane %v348, %v352
    %v354 = vlaneseq
    %v355 = vshrl.u32 %v354, 7
    %v356 = vsub.s32 1, %v355
    %v357 = vrot.slane %v348, %v356
    %v376 = vunpack.c.l.b16 %v332
    %v377 = vunpack.c.h.b16 %v332
    %v378 = vunpack.c.l.b16 %v333
    %v379 = vunpack.c.h.b16 %v333
    %v380 = vunpack.c.l.b16 %v334
    %v381 = vunpack.c.h.b16 %v334
    %v382 = vunpack.c.l.b16 %v335
    %v383 = vunpack.c.h.b16 %v335
    %v384 = vunpack.c.l.b16 %v336
    %v385 = vunpack.c.h.b16 %v336
    %v386 = vunpack.c.l.b16 %v337
    %v387 = vunpack.c.h.b16 %v337
    %v388 = vunpack.c.l.b16 %v338
    %v389 = vunpack.c.h.b16 %v338
    %v390 = vunpack.c.l.b16 %v339
    %v391 = vunpack.c.h.b16 %v339
    %v392 = vunpack.c.l.b16 %v340
    %v393 = vunpack.c.h.b16 %v340
    %v394 = vunpack.c.l.b16 %v341
    %v395 = vunpack.c.h.b16 %v341
    %v396 = vunpack.c.l.b16 %v342
    %v397 = vunpack.c.h.b16 %v342
    %v398 = vunpack.c.l.b16 %v343
    %v399 = vunpack.c.h.b16 %v343
    %v400 = vunpack.c.l.b16 %v344
    %v401 = vunpack.c.h.b16 %v344
    %v402 = vunpack.c.l.b16 %v345
    %v403 = vunpack.c.h.b16 %v345
    %v404 = vunpack.c.l.b16 %v346
    %v405 = vunpack.c.h.b16 %v346
    %v406 = vunpack.c.l.b16 %v347
    %v407 = vunpack.c.h.b16 %v347
    %v408 = vpack.c.b16 %v378, %v376
    %v409 = vpack.c.b16 %v379, %v377
    %v410 = vpack.c.b16 %v382, %v380
    %v411 = vpack.c.b16 %v383, %v381
    %v412 = vpack.c.b16 %v386, %v384
    %v413 = vpack.c.b16 %v387, %v385
    %v414 = vpack.c.b16 %v390, %v388
    %v415 = vpack.c.b16 %v391, %v389
    %v416 = vpack.c.b16 %v394, %v392
    %v417 = vpack.c.b16 %v395, %v393
    %v418 = vpack.c.b16 %v398, %v396
    %v419 = vpack.c.b16 %v399, %v397
    %v420 = vpack.c.b16 %v402, %v400
    %v421 = vpack.c.b16 %v403, %v401
    %v422 = vpack.c.b16 %v406, %v404
    %v423 = vpack.c.b16 %v407, %v405
    %440 = vmatprep.subr.bf16.mxu0 %v409
    %441 = vmatpush1.bf16.msra.mxu0 %v408
    %442 = vmatprep.subr.bf16.mxu0 %v411
    %443 = vmatpush1.bf16.msra.mxu0 %v410
    %444 = vmatprep.subr.bf16.mxu0 %v413
    %445 = vmatpush1.bf16.msra.mxu0 %v412
    %446 = vmatprep.subr.bf16.mxu0 %v415
    %447 = vmatpush1.bf16.msra.mxu0 %v414
    %448 = vmatprep.subr.bf16.mxu0 %v417
    %449 = vmatpush1.bf16.msra.mxu0 %v416
    %450 = vmatprep.subr.bf16.mxu0 %v419
    %451 = vmatpush1.bf16.msra.mxu0 %v418
    %452 = vmatprep.subr.bf16.mxu0 %v421
    %453 = vmatpush1.bf16.msra.mxu0 %v420
    %454 = vmatprep.subr.bf16.mxu0 %v423
    %455 = vmatpush1.bf16.msra.mxu0 %v422
    %456 = vmatprep.subr.bf16.mxu0 0
    %457 = vmatpush1.bf16.msra.mxu0 0
    %458 = vmatprep.subr.bf16.mxu0 0
    %459 = vmatpush1.bf16.msra.mxu0 0
    %460 = vmatprep.subr.bf16.mxu0 0
    %461 = vmatpush1.bf16.msra.mxu0 0
    %462 = vmatprep.subr.bf16.mxu0 0
    %463 = vmatpush1.bf16.msra.mxu0 0
    %464 = vmatprep.subr.bf16.mxu0 0
    %465 = vmatpush1.bf16.msra.mxu0 0
    %466 = vmatprep.subr.bf16.mxu0 0
    %467 = vmatpush1.bf16.msra.mxu0 0
    %468 = vmatprep.subr.bf16.mxu0 0
    %469 = vmatpush1.bf16.msra.mxu0 0
    %470 = vmatprep.subr.bf16.mxu0 0
    %471 = vmatpush1.bf16.msra.mxu0 0
    %472 = vmatprep.mubr.bf16.mxu0 0
    %473 = vmatmul.mubr.bf16.gmra.mrb[0].mxu0 %v324
    %v474 = vpop.f32.mrb[0].mxu0
    %v475 = vadd.f32 %v353, %v474
    %v476 = vpop.f32.mrb[0].mxu0
    %v477 = vadd.f32 %v357, %v476
    %v478 = vpop.f32.mrb[0].mxu0
    %v479 = vadd.f32 %v353, %v478
    %v480 = vpop.f32.mrb[0].mxu0
    %v481 = vadd.f32 %v357, %v480
    %482 = vmatprep.mubr.bf16.mxu0 0
    %483 = vmatmul.mubr.bf16.gmra.mrb[0].mxu0 %v325
    %v484 = vpop.f32.mrb[0].mxu0
    %v485 = vadd.f32 %v353, %v484
    %v486 = vpop.f32.mrb[0].mxu0
    %v487 = vadd.f32 %v357, %v486
    %v488 = vpop.f32.mrb[0].mxu0
    %v489 = vadd.f32 %v353, %v488
    %v490 = vpop.f32.mrb[0].mxu0
    %v491 = vadd.f32 %v357, %v490
    %492 = vmatprep.mubr.bf16.mxu0 0
    %493 = vmatmul.mubr.bf16.gmra.mrb[0].mxu0 %v326
    %v494 = vpop.f32.mrb[0].mxu0
    %v495 = vadd.f32 %v353, %v494
    %v496 = vpop.f32.mrb[0].mxu0
    %v497 = vadd.f32 %v357, %v496
    %v498 = vpop.f32.mrb[0].mxu0
    %v499 = vadd.f32 %v353, %v498
    %v500 = vpop.f32.mrb[0].mxu0
    %v501 = vadd.f32 %v357, %v500
    %502 = vmatprep.mubr.bf16.mxu0 0
    %503 = vmatmul.mubr.bf16.gmra.mrb[0].mxu0 %v327
    %v504 = vpop.f32.mrb[0].mxu0
    %v505 = vadd.f32 %v353, %v504
    %v506 = vpop.f32.mrb[0].mxu0
    %v507 = vadd.f32 %v357, %v506
    %v508 = vpop.f32.mrb[0].mxu0
    %v509 = vadd.f32 %v353, %v508
    %v510 = vpop.f32.mrb[0].mxu0
    %v511 = vadd.f32 %v357, %v510
    %512 = vmatprep.mubr.bf16.mxu0 0
    %513 = vmatmul.mubr.bf16.gmra.mrb[0].mxu0 %v328
    %v514 = vpop.f32.mrb[0].mxu0
    %v515 = vadd.f32 %v353, %v514
    %v516 = vpop.f32.mrb[0].mxu0
    %v517 = vadd.f32 %v357, %v516
    %v518 = vpop.f32.mrb[0].mxu0
    %v519 = vadd.f32 %v353, %v518
    %v520 = vpop.f32.mrb[0].mxu0
    %v521 = vadd.f32 %v357, %v520
    %522 = vmatprep.mubr.bf16.mxu0 0
    %523 = vmatmul.mubr.bf16.gmra.mrb[0].mxu0 %v329
    %v524 = vpop.f32.mrb[0].mxu0
    %v525 = vadd.f32 %v353, %v524
    %v526 = vpop.f32.mrb[0].mxu0
    %v527 = vadd.f32 %v357, %v526
    %v528 = vpop.f32.mrb[0].mxu0
    %v529 = vadd.f32 %v353, %v528
    %v530 = vpop.f32.mrb[0].mxu0
    %v531 = vadd.f32 %v357, %v530
    %532 = vmatprep.mubr.bf16.mxu0 0
    %533 = vmatmul.mubr.bf16.gmra.mrb[0].mxu0 %v330
    %v534 = vpop.f32.mrb[0].mxu0
    %v535 = vadd.f32 %v353, %v534
    %v536 = vpop.f32.mrb[0].mxu0
    %v537 = vadd.f32 %v357, %v536
    %v538 = vpop.f32.mrb[0].mxu0
    %v539 = vadd.f32 %v353, %v538
    %v540 = vpop.f32.mrb[0].mxu0
    %v541 = vadd.f32 %v357, %v540
    %542 = vmatprep.mubr.bf16.mxu0 0
    %543 = vmatmul.mubr.bf16.gmra.mrb[0].mxu0 %v331
    %v544 = vpop.f32.mrb[0].mxu0
    %v545 = vadd.f32 %v353, %v544
    %v546 = vpop.f32.mrb[0].mxu0
    %v547 = vadd.f32 %v357, %v546
    %v548 = vpop.f32.mrb[0].mxu0
    %v549 = vadd.f32 %v353, %v548
    %v550 = vpop.f32.mrb[0].mxu0
    %v551 = vadd.f32 %v357, %v550
    %552 = vdwg.mxu0
    %v553 = vmul.f32 %v475, 0.5
    %v554 = vmul.f32 %v477, 0.5
    %v555 = vmul.f32 %v479, 0.5
    %v556 = vmul.f32 %v481, 0.5
    %v557 = vmul.f32 %v485, 0.5
    %v558 = vmul.f32 %v487, 0.5
    %v559 = vmul.f32 %v489, 0.5
    %v560 = vmul.f32 %v491, 0.5
    %v561 = vmul.f32 %v495, 0.5
    %v562 = vmul.f32 %v497, 0.5
    %v563 = vmul.f32 %v499, 0.5
    %v564 = vmul.f32 %v501, 0.5
    %v565 = vmul.f32 %v505, 0.5
    %v566 = vmul.f32 %v507, 0.5
    %v567 = vmul.f32 %v509, 0.5
    %v568 = vmul.f32 %v511, 0.5
    %v569 = vmul.f32 %v515, 0.5
    %v570 = vmul.f32 %v517, 0.5
    %v571 = vmul.f32 %v519, 0.5
    %v572 = vmul.f32 %v521, 0.5
    %v573 = vmul.f32 %v525, 0.5
    %v574 = vmul.f32 %v527, 0.5
    %v575 = vmul.f32 %v529, 0.5
    %v576 = vmul.f32 %v531, 0.5
    %v577 = vmul.f32 %v535, 0.5
    %v578 = vmul.f32 %v537, 0.5
    %v579 = vmul.f32 %v539, 0.5
    %v580 = vmul.f32 %v541, 0.5
    %v581 = vmul.f32 %v545, 0.5
    %v582 = vmul.f32 %v547, 0.5
    %v583 = vmul.f32 %v549, 0.5
    %v584 = vmul.f32 %v551, 0.5
    %v585 = vmul.f32 %v475, 0.70710677
    %v586 = vmul.f32 %v477, 0.70710677
    %v587 = vmul.f32 %v479, 0.70710677
    %v588 = vmul.f32 %v481, 0.70710677
    %v589 = vmul.f32 %v485, 0.70710677
    %v590 = vmul.f32 %v487, 0.70710677
    %v591 = vmul.f32 %v489, 0.70710677
    %v592 = vmul.f32 %v491, 0.70710677
    %v593 = vmul.f32 %v495, 0.70710677
    %v594 = vmul.f32 %v497, 0.70710677
    %v595 = vmul.f32 %v499, 0.70710677
    %v596 = vmul.f32 %v501, 0.70710677
    %v597 = vmul.f32 %v505, 0.70710677
    %v598 = vmul.f32 %v507, 0.70710677
    %v599 = vmul.f32 %v509, 0.70710677
    %v600 = vmul.f32 %v511, 0.70710677
    %v601 = vmul.f32 %v515, 0.70710677
    %v602 = vmul.f32 %v517, 0.70710677
    %v603 = vmul.f32 %v519, 0.70710677
    %v604 = vmul.f32 %v521, 0.70710677
    %v605 = vmul.f32 %v525, 0.70710677
    %v606 = vmul.f32 %v527, 0.70710677
    %v607 = vmul.f32 %v529, 0.70710677
    %v608 = vmul.f32 %v531, 0.70710677
    %v609 = vmul.f32 %v535, 0.70710677
    %v610 = vmul.f32 %v537, 0.70710677
    %v611 = vmul.f32 %v539, 0.70710677
    %v612 = vmul.f32 %v541, 0.70710677
    %v613 = vmul.f32 %v545, 0.70710677
    %v614 = vmul.f32 %v547, 0.70710677
    %v615 = vmul.f32 %v549, 0.70710677
    %v616 = vmul.f32 %v551, 0.70710677
    %v617 = verf.f32.pop %v585
    %v618 = verf.f32.pop %v586
    %v619 = verf.f32.pop %v587
    %v620 = verf.f32.pop %v588
    %v621 = verf.f32.pop %v589
    %v622 = verf.f32.pop %v590
    %v623 = verf.f32.pop %v591
    %v624 = verf.f32.pop %v592
    %v625 = verf.f32.pop %v593
    %v626 = verf.f32.pop %v594
    %v627 = verf.f32.pop %v595
    %v628 = verf.f32.pop %v596
    %v629 = verf.f32.pop %v597
    %v630 = verf.f32.pop %v598
    %v631 = verf.f32.pop %v599
    %v632 = verf.f32.pop %v600
    %v633 = verf.f32.pop %v601
    %v634 = verf.f32.pop %v602
    %v635 = verf.f32.pop %v603
    %v636 = verf.f32.pop %v604
    %v637 = verf.f32.pop %v605
    %v638 = verf.f32.pop %v606
    %v639 = verf.f32.pop %v607
    %v640 = verf.f32.pop %v608
    %v641 = verf.f32.pop %v609
    %v642 = verf.f32.pop %v610
    %v643 = verf.f32.pop %v611
    %v644 = verf.f32.pop %v612
    %v645 = verf.f32.pop %v613
    %v646 = verf.f32.pop %v614
    %v647 = verf.f32.pop %v615
    %v648 = verf.f32.pop %v616
    %v649 = vadd.f32 %v617, 1.0
    %v650 = vadd.f32 %v618, 1.0
    %v651 = vadd.f32 %v619, 1.0
    %v652 = vadd.f32 %v620, 1.0
    %v653 = vadd.f32 %v621, 1.0
    %v654 = vadd.f32 %v622, 1.0
    %v655 = vadd.f32 %v623, 1.0
    %v656 = vadd.f32 %v624, 1.0
    %v657 = vadd.f32 %v625, 1.0
    %v658 = vadd.f32 %v626, 1.0
    %v659 = vadd.f32 %v627, 1.0
    %v660 = vadd.f32 %v628, 1.0
    %v661 = vadd.f32 %v629, 1.0
    %v662 = vadd.f32 %v630, 1.0
    %v663 = vadd.f32 %v631, 1.0
    %v664 = vadd.f32 %v632, 1.0
    %v665 = vadd.f32 %v633, 1.0
    %v666 = vadd.f32 %v634, 1.0
    %v667 = vadd.f32 %v635, 1.0
    %v668 = vadd.f32 %v636, 1.0
    %v669 = vadd.f32 %v637, 1.0
    %v670 = vadd.f32 %v638, 1.0
    %v671 = vadd.f32 %v639, 1.0
    %v672 = vadd.f32 %v640, 1.0
    %v673 = vadd.f32 %v641, 1.0
    %v674 = vadd.f32 %v642, 1.0
    %v675 = vadd.f32 %v643, 1.0
    %v676 = vadd.f32 %v644, 1.0
    %v677 = vadd.f32 %v645, 1.0
    %v678 = vadd.f32 %v646, 1.0
    %v679 = vadd.f32 %v647, 1.0
    %v680 = vadd.f32 %v648, 1.0
    %v681 = vmul.f32 %v553, %v649
    %v682 = vmul.f32 %v554, %v650
    %v683 = vmul.f32 %v555, %v651
    %v684 = vmul.f32 %v556, %v652
    %v685 = vmul.f32 %v557, %v653
    %v686 = vmul.f32 %v558, %v654
    %v687 = vmul.f32 %v559, %v655
    %v688 = vmul.f32 %v560, %v656
    %v689 = vmul.f32 %v561, %v657
    %v690 = vmul.f32 %v562, %v658
    %v691 = vmul.f32 %v563, %v659
    %v692 = vmul.f32 %v564, %v660
    %v693 = vmul.f32 %v565, %v661
    %v694 = vmul.f32 %v566, %v662
    %v695 = vmul.f32 %v567, %v663
    %v696 = vmul.f32 %v568, %v664
    %v697 = vmul.f32 %v569, %v665
    %v698 = vmul.f32 %v570, %v666
    %v699 = vmul.f32 %v571, %v667
    %v700 = vmul.f32 %v572, %v668
    %v701 = vmul.f32 %v573, %v669
    %v702 = vmul.f32 %v574, %v670
    %v703 = vmul.f32 %v575, %v671
    %v704 = vmul.f32 %v576, %v672
    %v705 = vmul.f32 %v577, %v673
    %v706 = vmul.f32 %v578, %v674
    %v707 = vmul.f32 %v579, %v675
    %v708 = vmul.f32 %v580, %v676
    %v709 = vmul.f32 %v581, %v677
    %v710 = vmul.f32 %v582, %v678
    %v711 = vmul.f32 %v583, %v679
    %v712 = vmul.f32 %v584, %v680
    %v713 = vpack.c.bf16 %v683, %v681
    %v714 = vpack.c.bf16 %v684, %v682
    %v715 = vpack.c.bf16 %v687, %v685
    %v716 = vpack.c.bf16 %v688, %v686
    %v717 = vpack.c.bf16 %v691, %v689
    %v718 = vpack.c.bf16 %v692, %v690
    %v719 = vpack.c.bf16 %v695, %v693
    %v720 = vpack.c.bf16 %v696, %v694
    %v721 = vpack.c.bf16 %v699, %v697
    %v722 = vpack.c.bf16 %v700, %v698
    %v723 = vpack.c.bf16 %v703, %v701
    %v724 = vpack.c.bf16 %v704, %v702
    %v725 = vpack.c.bf16 %v707, %v705
    %v726 = vpack.c.bf16 %v708, %v706
    %v727 = vpack.c.bf16 %v711, %v709
    %v728 = vpack.c.bf16 %v712, %v710
    %v729 = vld [vmem:[#allocation7] sm:$0xf]
    %v730 = vld [vmem:[#allocation7 + $0x4] sm:$0xf]
    %v731 = vld [vmem:[#allocation7 + $0x8] sm:$0xf]
    %v732 = vld [vmem:[#allocation7 + $0xc] sm:$0xf]
    %v733 = vld [vmem:[#allocation7 + $0x10] sm:$0xf]
    %v734 = vld [vmem:[#allocation7 + $0x14] sm:$0xf]
    %v735 = vld [vmem:[#allocation7 + $0x18] sm:$0xf]
    %v736 = vld [vmem:[#allocation7 + $0x1c] sm:$0xf]
    %v737 = vld [vmem:[#allocation7 + $0x20] sm:$0xf]
    %v738 = vld [vmem:[#allocation7 + $0x24] sm:$0xf]
    %v739 = vld [vmem:[#allocation7 + $0x28] sm:$0xf]
    %v740 = vld [vmem:[#allocation7 + $0x2c] sm:$0xf]
    %v741 = vld [vmem:[#allocation7 + $0x30] sm:$0xf]
    %v742 = vld [vmem:[#allocation7 + $0x34] sm:$0xf]
    %v743 = vld [vmem:[#allocation7 + $0x38] sm:$0xf]
    %v744 = vld [vmem:[#allocation7 + $0x3c] sm:$0xf]
    %v745 = vld [vmem:[#allocation7 + $0x40] sm:$0xf]
    %v746 = vld [vmem:[#allocation7 + $0x44] sm:$0xf]
    %v747 = vld [vmem:[#allocation7 + $0x48] sm:$0xf]
    %v748 = vld [vmem:[#allocation7 + $0x4c] sm:$0xf]
    %v749 = vld [vmem:[#allocation7 + $0x50] sm:$0xf]
    %v750 = vld [vmem:[#allocation7 + $0x54] sm:$0xf]
    %v751 = vld [vmem:[#allocation7 + $0x58] sm:$0xf]
    %v752 = vld [vmem:[#allocation7 + $0x5c] sm:$0xf]
    %v753 = vld [vmem:[#allocation7 + $0x60] sm:$0xf]
    %v754 = vld [vmem:[#allocation7 + $0x64] sm:$0xf]
    %v755 = vld [vmem:[#allocation7 + $0x68] sm:$0xf]
    %v756 = vld [vmem:[#allocation7 + $0x6c] sm:$0xf]
    %v757 = vld [vmem:[#allocation7 + $0x70] sm:$0xf]
    %v758 = vld [vmem:[#allocation7 + $0x74] sm:$0xf]
    %v759 = vld [vmem:[#allocation7 + $0x78] sm:$0xf]
    %v760 = vld [vmem:[#allocation7 + $0x7c] sm:$0xf]
    %v761 = vld [vmem:[%s6] sm:$0x1]
    %v763 = vlaneseq
    %v764 = vshrl.u32 %v763, 7
    %v765 = vsub.s32 0, %v764
    %v766 = vrot.slane %v761, %v765
    %v800 = vunpack.c.l.b16 %v729
    %v801 = vunpack.c.l.b16 %v730
    %v802 = vunpack.c.l.b16 %v731
    %v803 = vunpack.c.l.b16 %v732
    %v804 = vunpack.c.l.b16 %v733
    %v805 = vunpack.c.l.b16 %v734
    %v806 = vunpack.c.l.b16 %v735
    %v807 = vunpack.c.l.b16 %v736
    %v808 = vunpack.c.l.b16 %v737
    %v809 = vunpack.c.l.b16 %v738
    %v810 = vunpack.c.l.b16 %v739
    %v811 = vunpack.c.l.b16 %v740
    %v812 = vunpack.c.l.b16 %v741
    %v813 = vunpack.c.l.b16 %v742
    %v814 = vunpack.c.l.b16 %v743
    %v815 = vunpack.c.l.b16 %v744
    %v816 = vunpack.c.l.b16 %v745
    %v817 = vunpack.c.l.b16 %v746
    %v818 = vunpack.c.l.b16 %v747
    %v819 = vunpack.c.l.b16 %v748
    %v820 = vunpack.c.l.b16 %v749
    %v821 = vunpack.c.l.b16 %v750
    %v822 = vunpack.c.l.b16 %v751
    %v823 = vunpack.c.l.b16 %v752
    %v824 = vunpack.c.l.b16 %v753
    %v825 = vunpack.c.l.b16 %v754
    %v826 = vunpack.c.l.b16 %v755
    %v827 = vunpack.c.l.b16 %v756
    %v828 = vunpack.c.l.b16 %v757
    %v829 = vunpack.c.l.b16 %v758
    %v830 = vunpack.c.l.b16 %v759
    %v831 = vunpack.c.l.b16 %v760
    %v832 = vpack.c.b16 %v801, %v800
    %v833 = vpack.c.b16 %v803, %v802
    %v834 = vpack.c.b16 %v805, %v804
    %v835 = vpack.c.b16 %v807, %v806
    %v836 = vpack.c.b16 %v809, %v808
    %v837 = vpack.c.b16 %v811, %v810
    %v838 = vpack.c.b16 %v813, %v812
    %v839 = vpack.c.b16 %v815, %v814
    %v840 = vpack.c.b16 %v817, %v816
    %v841 = vpack.c.b16 %v819, %v818
    %v842 = vpack.c.b16 %v821, %v820
    %v843 = vpack.c.b16 %v823, %v822
    %v844 = vpack.c.b16 %v825, %v824
    %v845 = vpack.c.b16 %v827, %v826
    %v846 = vpack.c.b16 %v829, %v828
    %v847 = vpack.c.b16 %v831, %v830
    %864 = vmatprep.subr.bf16.mxu0 0
    %865 = vmatpush1.bf16.msra.mxu0 %v832
    %866 = vmatprep.subr.bf16.mxu0 0
    %867 = vmatpush1.bf16.msra.mxu0 %v833
    %868 = vmatprep.subr.bf16.mxu0 0
    %869 = vmatpush1.bf16.msra.mxu0 %v834
    %870 = vmatprep.subr.bf16.mxu0 0
    %871 = vmatpush1.bf16.msra.mxu0 %v835
    %872 = vmatprep.subr.bf16.mxu0 0
    %873 = vmatpush1.bf16.msra.mxu0 %v836
    %874 = vmatprep.subr.bf16.mxu0 0
    %875 = vmatpush1.bf16.msra.mxu0 %v837
    %876 = vmatprep.subr.bf16.mxu0 0
    %877 = vmatpush1.bf16.msra.mxu0 %v838
    %878 = vmatprep.subr.bf16.mxu0 0
    %879 = vmatpush1.bf16.msra.mxu0 %v839
    %880 = vmatprep.subr.bf16.mxu0 0
    %881 = vmatpush1.bf16.msra.mxu0 %v840
    %882 = vmatprep.subr.bf16.mxu0 0
    %883 = vmatpush1.bf16.msra.mxu0 %v841
    %884 = vmatprep.subr.bf16.mxu0 0
    %885 = vmatpush1.bf16.msra.mxu0 %v842
    %886 = vmatprep.subr.bf16.mxu0 0
    %887 = vmatpush1.bf16.msra.mxu0 %v843
    %888 = vmatprep.subr.bf16.mxu0 0
    %889 = vmatpush1.bf16.msra.mxu0 %v844
    %890 = vmatprep.subr.bf16.mxu0 0
    %891 = vmatpush1.bf16.msra.mxu0 %v845
    %892 = vmatprep.subr.bf16.mxu0 0
    %893 = vmatpush1.bf16.msra.mxu0 %v846
    %894 = vmatprep.subr.bf16.mxu0 0
    %895 = vmatpush1.bf16.msra.mxu0 %v847
    %896 = vmatprep.mubr.bf16.mxu0 %v714
    %897 = vmatmul.mubr.bf16.gmra.mrb[0].mxu0 %v713
    %v898 = vpop.f32.mrb[0].mxu0
    %v899 = vadd.f32 %v766, %v898
    %v900 = vpop.f32.mrb[0].mxu0
    %v901 = vpop.f32.mrb[0].mxu0
    %v902 = vadd.f32 %v766, %v901
    %v903 = vpop.f32.mrb[0].mxu0
    %904 = vmatprep.mubr.bf16.mxu0 %v716
    %905 = vmatmul.mubr.bf16.gmra.mrb[0].mxu0 %v715
    %v906 = vpop.f32.mrb[0].mxu0
    %v907 = vadd.f32 %v766, %v906
    %v908 = vpop.f32.mrb[0].mxu0
    %v909 = vpop.f32.mrb[0].mxu0
    %v910 = vadd.f32 %v766, %v909
    %v911 = vpop.f32.mrb[0].mxu0
    %912 = vmatprep.mubr.bf16.mxu0 %v718
    %913 = vmatmul.mubr.bf16.gmra.mrb[0].mxu0 %v717
    %v914 = vpop.f32.mrb[0].mxu0
    %v915 = vadd.f32 %v766, %v914
    %v916 = vpop.f32.mrb[0].mxu0
    %v917 = vpop.f32.mrb[0].mxu0
    %v918 = vadd.f32 %v766, %v917
    %v919 = vpop.f32.mrb[0].mxu0
    %920 = vmatprep.mubr.bf16.mxu0 %v720
    %921 = vmatmul.mubr.bf16.gmra.mrb[0].mxu0 %v719
    %v922 = vpop.f32.mrb[0].mxu0
    %v923 = vadd.f32 %v766, %v922
    %v924 = vpop.f32.mrb[0].mxu0
    %v925 = vpop.f32.mrb[0].mxu0
    %v926 = vadd.f32 %v766, %v925
    %v927 = vpop.f32.mrb[0].mxu0
    %928 = vmatprep.mubr.bf16.mxu0 %v722
    %929 = vmatmul.mubr.bf16.gmra.mrb[0].mxu0 %v721
    %v930 = vpop.f32.mrb[0].mxu0
    %v931 = vadd.f32 %v766, %v930
    %v932 = vpop.f32.mrb[0].mxu0
    %v933 = vpop.f32.mrb[0].mxu0
    %v934 = vadd.f32 %v766, %v933
    %v935 = vpop.f32.mrb[0].mxu0
    %936 = vmatprep.mubr.bf16.mxu0 %v724
    %937 = vmatmul.mubr.bf16.gmra.mrb[0].mxu0 %v723
    %v938 = vpop.f32.mrb[0].mxu0
    %v939 = vadd.f32 %v766, %v938
    %v940 = vpop.f32.mrb[0].mxu0
    %v941 = vpop.f32.mrb[0].mxu0
    %v942 = vadd.f32 %v766, %v941
    %v943 = vpop.f32.mrb[0].mxu0
    %944 = vmatprep.mubr.bf16.mxu0 %v726
    %945 = vmatmul.mubr.bf16.gmra.mrb[0].mxu0 %v725
    %v946 = vpop.f32.mrb[0].mxu0
    %v947 = vadd.f32 %v766, %v946
    %v948 = vpop.f32.mrb[0].mxu0
    %v949 = vpop.f32.mrb[0].mxu0
    %v950 = vadd.f32 %v766, %v949
    %v951 = vpop.f32.mrb[0].mxu0
    %952 = vmatprep.mubr.bf16.mxu0 %v728
    %953 = vmatmul.mubr.bf16.gmra.mrb[0].mxu0 %v727
    %v954 = vpop.f32.mrb[0].mxu0
    %v955 = vadd.f32 %v766, %v954
    %v956 = vpop.f32.mrb[0].mxu0
    %v957 = vpop.f32.mrb[0].mxu0
    %v958 = vadd.f32 %v766, %v957
    %v959 = vpop.f32.mrb[0].mxu0
    %960 = vdwg.mxu0
    %961 = vst [vmem:[#allocation8] sm:$0xff] %v899
    %962 = vst [vmem:[#allocation8 + $0x8] sm:$0xff] %v902
    %963 = vst [vmem:[#allocation8 + $0x10] sm:$0xff] %v907
    %964 = vst [vmem:[#allocation8 + $0x18] sm:$0xff] %v910
    %965 = vst [vmem:[#allocation8 + $0x20] sm:$0xff] %v915
    %966 = vst [vmem:[#allocation8 + $0x28] sm:$0xff] %v918
    %967 = vst [vmem:[#allocation8 + $0x30] sm:$0xff] %v923
    %968 = vst [vmem:[#allocation8 + $0x38] sm:$0xff] %v926
    %969 = vst [vmem:[#allocation8 + $0x40] sm:$0xff] %v931
    %970 = vst [vmem:[#allocation8 + $0x48] sm:$0xff] %v934
    %971 = vst [vmem:[#allocation8 + $0x50] sm:$0xff] %v939
    %972 = vst [vmem:[#allocation8 + $0x58] sm:$0xff] %v942
    %973 = vst [vmem:[#allocation8 + $0x60] sm:$0xff] %v947
    %974 = vst [vmem:[#allocation8 + $0x68] sm:$0xff] %v950
    %975 = vst [vmem:[#allocation8 + $0x70] sm:$0xff] %v955
    %976 = vst [vmem:[#allocation8 + $0x78] sm:$0xff] %v958
    // Predicated region
    $region42: #{tpu_custom_call.1} parent=1 // pred_check
      _
    $region43: #{tpu_custom_call.1} parent=1 // pred_check_branch
      %978 = sbr.rel (0) target = $region45
    $region44: #{tpu_custom_call.1} parent=1 // pred_region
      %s980 = ssub.s32 2048, 2048
      %981 = vsyncadd [#allocation4], %s980
      %s982 = sshll.u32 [#allocation8], 4
      %s983 = int_to_ptr.vmem [resolvable:$true] %s982
      %988 = dma.vmem_to_hbm [thread:$0]  %s983, 2048, %s7, [#allocation4], 128, 128, 8
    $region45: #{tpu_custom_call.1} parent=1 // pred_fallthru
      _
    // Predicated region
    $region46: #{tpu_custom_call.1} parent=1 // pred_check
      _
    $region47: #{tpu_custom_call.1} parent=1 // pred_check_branch
      %990 = sbr.rel (0) target = $region49
    $region48: #{tpu_custom_call.1} parent=1 // pred_region
      %991 = dma.done [#allocation4], 2048
    $region49: #{tpu_custom_call.1} parent=1 // pred_fallthru
      _
    %992 = vsyncpa [#allocation3], 1
    %993 = vsyncpa [#allocation6], 1
    %994 = vsyncpa [#allocation4], 1

</llo_original>
